<compile_context>
chip_gen: v5e
topology: v5e:2x2
jax: 0.10.0
libtpu: 0.0.40
codegen_flags: <defaults>
</compile_context>

<pallas_src>
import functools

import jax
import jax.numpy as jnp
from jax.experimental import pallas as pl
from jax.experimental.pallas import tpu as pltpu


def _bn_train_fused(h, gamma, beta, eps=1e-5):
    """Training-mode BatchNorm1d, fused to one mul + one add per element."""
    mean = jnp.mean(h, axis=0, keepdims=True)
    var = jnp.mean(h * h, axis=0, keepdims=True) - mean * mean  # biased var
    scale = gamma * jax.lax.rsqrt(var + eps)
    shift = beta - mean * scale
    return h * scale + shift


def modelc_kernel(x_ref, w0_ref, w1_ref, w2_ref, vec_ref, out_ref):
    x = x_ref[...]                                              # (B, D)

    # Packed per-feature vectors (row-vector slices, broadcast over batch).
    g1 = vec_ref[0:1, 0:100]
    be1 = vec_ref[1:2, 0:100]
    g2 = vec_ref[2:3, 0:50]
    be2 = vec_ref[3:4, 0:50]
    b2 = vec_ref[4:5, 0:10]

    # fc0 (bias dropped: cancelled by BN mean subtraction) -> BN -> ReLU
    h = jnp.dot(x, w0_ref[...], preferred_element_type=jnp.float32)
    h = jnp.maximum(_bn_train_fused(h, g1, be1), 0.0)

    # fc1 (bias dropped) -> BN -> ReLU
    h = jnp.dot(h, w1_ref[...], preferred_element_type=jnp.float32)
    h = jnp.maximum(_bn_train_fused(h, g2, be2), 0.0)

    # fc2 -> log_softmax(dim=1)
    logits = jnp.dot(h, w2_ref[...], preferred_element_type=jnp.float32) + b2
    m = jnp.max(logits, axis=1, keepdims=True)
    shifted = logits - m
    lse = jnp.log(jnp.sum(jnp.exp(shifted), axis=1, keepdims=True))
    out_ref[...] = shifted - lse


def _pack_vecs(params):
    """Pack the five small per-feature vectors into one (8, 128) array."""
    v = jnp.zeros((8, 128), jnp.float32)
    v = v.at[0, :100].set(params["g1"].reshape(-1))
    v = v.at[1, :100].set(params["be1"].reshape(-1))
    v = v.at[2, :50].set(params["g2"].reshape(-1))
    v = v.at[3, :50].set(params["be2"].reshape(-1))
    v = v.at[4, :10].set(params["b2"].reshape(-1))
    return v


@functools.partial(jax.jit, static_argnames=("image_size",))
def modelc_forward(x, params, image_size):
    # Flatten exactly like torch's x.view(-1, image_size).
    xf = x.reshape(-1, image_size).astype(jnp.float32)
    B = xf.shape[0]

    vecs = _pack_vecs(params)   # tiny; fused by XLA around the kernel
    args = (xf, params["w0"], params["w1"], params["w2"], vecs)

    # Everything is tiny -> single block, whole arrays resident in VMEM.
    full_spec = lambda a: pl.BlockSpec(a.shape, lambda: (0,) * a.ndim)

    return pl.pallas_call(
        modelc_kernel,
        out_shape=jax.ShapeDtypeStruct((B, 10), jnp.float32),
        grid=(),
        in_specs=[full_spec(a) for a in args],
        out_specs=pl.BlockSpec((B, 10), lambda: (0, 0)),
    )(*args)


def init_params(key, image_size):
    # PyTorch-style uniform fan-in init; BN gamma=1, beta=0 (training default).
    def linear(key, fan_in, fan_out):
        k1, k2 = jax.random.split(key)
        bound = 1.0 / jnp.sqrt(fan_in)
        w = jax.random.uniform(k1, (fan_in, fan_out), jnp.float32, -bound, bound)
        b = jax.random.uniform(k2, (1, fan_out), jnp.float32, -bound, bound)
        return w, b

    k0, k1, k2 = jax.random.split(key, 3)
    w0, b0 = linear(k0, image_size, 100)
    w1, b1 = linear(k1, 100, 50)
    w2, b2 = linear(k2, 50, 10)
    return dict(
        w0=w0, b0=b0,
        g1=jnp.ones((1, 100), jnp.float32), be1=jnp.zeros((1, 100), jnp.float32),
        w1=w1, b1=b1,
        g2=jnp.ones((1, 50), jnp.float32), be2=jnp.zeros((1, 50), jnp.float32),
        w2=w2, b2=b2,
    )


def modelc_reference(x, params, image_size):
    # Faithful PyTorch math (including the fc0/fc1 biases and two-pass BN)
    # to prove the kernel's simplifications are exact.
    def bn(h, gamma, beta, eps=1e-5):
        mean = jnp.mean(h, axis=0, keepdims=True)
        var = jnp.mean((h - mean) ** 2, axis=0, keepdims=True)
        return (h - mean) / jnp.sqrt(var + eps) * gamma + beta

    h = x.reshape(-1, image_size).astype(jnp.float32)
    h = h @ params["w0"] + params["b0"]
    h = jnp.maximum(bn(h, params["g1"], params["be1"]), 0.0)
    h = h @ params["w1"] + params["b1"]
    h = jnp.maximum(bn(h, params["g2"], params["be2"]), 0.0)
    logits = h @ params["w2"] + params["b2"]
    return jax.nn.log_softmax(logits, axis=1)


if __name__ == "__main__":
    IMAGE_SIZE = 16 * 16   # 1-channel 16x16 images
    BATCH = 8

    key = jax.random.PRNGKey(0)
    kx, kp = jax.random.split(key)
    x = jax.random.normal(kx, (BATCH, 1, 16, 16), jnp.float32)   # NCHW
    params = init_params(kp, IMAGE_SIZE)

    out = modelc_forward(x, params, IMAGE_SIZE)
    out = jax.block_until_ready(out)

    ref = modelc_reference(x, params, IMAGE_SIZE)
    assert out.shape == (BATCH, 10)
    assert jnp.allclose(out, ref, atol=1e-4, rtol=1e-4), "mismatch vs reference"
    # log_softmax rows should sum (in prob space) to ~1
    assert jnp.allclose(jnp.sum(jnp.exp(out), axis=1), 1.0, atol=1e-4)

    print("KERNEL_OK")
</pallas_src>

<mosaic_0001>
module attributes {stable_mosaic.version = 11 : i64} {
  func.func @modelc_kernel(%arg0: memref<8x256xf32, #tpu.memory_space<vmem>>, %arg1: memref<256x100xf32, #tpu.memory_space<vmem>>, %arg2: memref<100x50xf32, #tpu.memory_space<vmem>>, %arg3: memref<50x10xf32, #tpu.memory_space<vmem>>, %arg4: memref<8x128xf32, #tpu.memory_space<vmem>>, %arg5: memref<8x10xf32, #tpu.memory_space<vmem>>) attributes {dimension_semantics = [], scalar_prefetch = 0 : i64, scratch_operands = 0 : i64, tpu.core_type = #tpu.core_type<tc>} {
    %c0 = arith.constant 0 : index
    %c0_0 = arith.constant 0 : index
    %0 = vector.load %arg0[%c0, %c0_0] : memref<8x256xf32, #tpu.memory_space<vmem>>, vector<8x256xf32>
    %c0_1 = arith.constant 0 : index
    %c0_2 = arith.constant 0 : index
    %1 = vector.load %arg4[%c0_1, %c0_2] : memref<8x128xf32, #tpu.memory_space<vmem>>, vector<1x100xf32>
    %c1 = arith.constant 1 : index
    %c0_3 = arith.constant 0 : index
    %2 = vector.load %arg4[%c1, %c0_3] : memref<8x128xf32, #tpu.memory_space<vmem>>, vector<1x100xf32>
    %c2 = arith.constant 2 : index
    %c0_4 = arith.constant 0 : index
    %3 = vector.load %arg4[%c2, %c0_4] : memref<8x128xf32, #tpu.memory_space<vmem>>, vector<1x50xf32>
    %c3 = arith.constant 3 : index
    %c0_5 = arith.constant 0 : index
    %4 = vector.load %arg4[%c3, %c0_5] : memref<8x128xf32, #tpu.memory_space<vmem>>, vector<1x50xf32>
    %c4 = arith.constant 4 : index
    %c0_6 = arith.constant 0 : index
    %5 = vector.load %arg4[%c4, %c0_6] : memref<8x128xf32, #tpu.memory_space<vmem>>, vector<1x10xf32>
    %c0_7 = arith.constant 0 : index
    %c0_8 = arith.constant 0 : index
    %6 = vector.load %arg1[%c0_7, %c0_8] : memref<256x100xf32, #tpu.memory_space<vmem>>, vector<256x100xf32>
    %cst = arith.constant dense<0.000000e+00> : vector<8x100xf32>
    %7 = tpu.matmul %0, %6, %cst {dimension_numbers = #tpu.dot_dimension_numbers<[1], [0], [0], [1], [0, 0, 1, 1], [], []>} : vector<8x256xf32>, vector<256x100xf32>, vector<8x100xf32> -> vector<8x100xf32>
    %cst_9 = arith.constant dense<0.000000e+00> : vector<100xf32>
    %8 = vector.multi_reduction <add>, %7, %cst_9 [0] : vector<8x100xf32> to vector<100xf32>
    %9 = vector.shape_cast %8 : vector<100xf32> to vector<1x100xf32>
    %cst_10 = arith.constant 8.000000e+00 : f32
    %10 = vector.broadcast %cst_10 : f32 to vector<1x100xf32>
    %11 = arith.divf %9, %10 : vector<1x100xf32>
    %12 = arith.mulf %7, %7 : vector<8x100xf32>
    %cst_11 = arith.constant dense<0.000000e+00> : vector<100xf32>
    %13 = vector.multi_reduction <add>, %12, %cst_11 [0] : vector<8x100xf32> to vector<100xf32>
    %14 = vector.shape_cast %13 : vector<100xf32> to vector<1x100xf32>
    %cst_12 = arith.constant 8.000000e+00 : f32
    %15 = vector.broadcast %cst_12 : f32 to vector<1x100xf32>
    %16 = arith.divf %14, %15 : vector<1x100xf32>
    %17 = arith.mulf %11, %11 : vector<1x100xf32>
    %18 = arith.subf %16, %17 : vector<1x100xf32>
    %cst_13 = arith.constant 9.99999974E-6 : f32
    %19 = vector.broadcast %cst_13 : f32 to vector<1x100xf32>
    %20 = arith.addf %18, %19 : vector<1x100xf32>
    %21 = math.rsqrt %20 : vector<1x100xf32>
    %22 = arith.mulf %1, %21 : vector<1x100xf32>
    %23 = arith.mulf %11, %22 : vector<1x100xf32>
    %24 = arith.subf %2, %23 : vector<1x100xf32>
    %25 = vector.broadcast %22 : vector<1x100xf32> to vector<8x100xf32>
    %26 = arith.mulf %7, %25 : vector<8x100xf32>
    %27 = vector.broadcast %24 : vector<1x100xf32> to vector<8x100xf32>
    %28 = arith.addf %26, %27 : vector<8x100xf32>
    %cst_14 = arith.constant 0.000000e+00 : f32
    %29 = vector.broadcast %cst_14 : f32 to vector<8x100xf32>
    %30 = arith.maximumf %28, %29 : vector<8x100xf32>
    %c0_15 = arith.constant 0 : index
    %c0_16 = arith.constant 0 : index
    %31 = vector.load %arg2[%c0_15, %c0_16] : memref<100x50xf32, #tpu.memory_space<vmem>>, vector<100x50xf32>
    %cst_17 = arith.constant dense<0.000000e+00> : vector<8x50xf32>
    %32 = tpu.matmul %30, %31, %cst_17 {dimension_numbers = #tpu.dot_dimension_numbers<[1], [0], [0], [1], [0, 0, 1, 1], [], []>} : vector<8x100xf32>, vector<100x50xf32>, vector<8x50xf32> -> vector<8x50xf32>
    %cst_18 = arith.constant dense<0.000000e+00> : vector<50xf32>
    %33 = vector.multi_reduction <add>, %32, %cst_18 [0] : vector<8x50xf32> to vector<50xf32>
    %34 = vector.shape_cast %33 : vector<50xf32> to vector<1x50xf32>
    %cst_19 = arith.constant 8.000000e+00 : f32
    %35 = vector.broadcast %cst_19 : f32 to vector<1x50xf32>
    %36 = arith.divf %34, %35 : vector<1x50xf32>
    %37 = arith.mulf %32, %32 : vector<8x50xf32>
    %cst_20 = arith.constant dense<0.000000e+00> : vector<50xf32>
    %38 = vector.multi_reduction <add>, %37, %cst_20 [0] : vector<8x50xf32> to vector<50xf32>
    %39 = vector.shape_cast %38 : vector<50xf32> to vector<1x50xf32>
    %cst_21 = arith.constant 8.000000e+00 : f32
    %40 = vector.broadcast %cst_21 : f32 to vector<1x50xf32>
    %41 = arith.divf %39, %40 : vector<1x50xf32>
    %42 = arith.mulf %36, %36 : vector<1x50xf32>
    %43 = arith.subf %41, %42 : vector<1x50xf32>
    %cst_22 = arith.constant 9.99999974E-6 : f32
    %44 = vector.broadcast %cst_22 : f32 to vector<1x50xf32>
    %45 = arith.addf %43, %44 : vector<1x50xf32>
    %46 = math.rsqrt %45 : vector<1x50xf32>
    %47 = arith.mulf %3, %46 : vector<1x50xf32>
    %48 = arith.mulf %36, %47 : vector<1x50xf32>
    %49 = arith.subf %4, %48 : vector<1x50xf32>
    %50 = vector.broadcast %47 : vector<1x50xf32> to vector<8x50xf32>
    %51 = arith.mulf %32, %50 : vector<8x50xf32>
    %52 = vector.broadcast %49 : vector<1x50xf32> to vector<8x50xf32>
    %53 = arith.addf %51, %52 : vector<8x50xf32>
    %cst_23 = arith.constant 0.000000e+00 : f32
    %54 = vector.broadcast %cst_23 : f32 to vector<8x50xf32>
    %55 = arith.maximumf %53, %54 : vector<8x50xf32>
    %c0_24 = arith.constant 0 : index
    %c0_25 = arith.constant 0 : index
    %56 = vector.load %arg3[%c0_24, %c0_25] : memref<50x10xf32, #tpu.memory_space<vmem>>, vector<50x10xf32>
    %cst_26 = arith.constant dense<0.000000e+00> : vector<8x10xf32>
    %57 = tpu.matmul %55, %56, %cst_26 {dimension_numbers = #tpu.dot_dimension_numbers<[1], [0], [0], [1], [0, 0, 1, 1], [], []>} : vector<8x50xf32>, vector<50x10xf32>, vector<8x10xf32> -> vector<8x10xf32>
    %58 = vector.broadcast %5 : vector<1x10xf32> to vector<8x10xf32>
    %59 = arith.addf %57, %58 : vector<8x10xf32>
    %cst_27 = arith.constant dense<0xFF800000> : vector<8xf32>
    %60 = vector.multi_reduction <maximumf>, %59, %cst_27 [1] : vector<8x10xf32> to vector<8xf32>
    %61 = vector.shape_cast %60 : vector<8xf32> to vector<8x1xf32>
    %62 = vector.broadcast %61 : vector<8x1xf32> to vector<8x10xf32>
    %63 = arith.subf %59, %62 : vector<8x10xf32>
    %64 = math.exp %63 : vector<8x10xf32>
    %cst_28 = arith.constant dense<0.000000e+00> : vector<8xf32>
    %65 = vector.multi_reduction <add>, %64, %cst_28 [1] : vector<8x10xf32> to vector<8xf32>
    %66 = vector.shape_cast %65 : vector<8xf32> to vector<8x1xf32>
    %67 = math.log %66 : vector<8x1xf32>
    %68 = vector.broadcast %67 : vector<8x1xf32> to vector<8x10xf32>
    %69 = arith.subf %63, %68 : vector<8x10xf32>
    %c0_29 = arith.constant 0 : index
    %c0_30 = arith.constant 0 : index
    %70 = vector.load %arg5[%c0_29, %c0_30] : memref<8x10xf32, #tpu.memory_space<vmem>>, vector<8x10xf32>
    tpu.vector_store %arg5[%c0_29, %c0_30], %69 {strides = array<i32>} : memref<8x10xf32, #tpu.memory_space<vmem>>, vector<8x10xf32>,
    return
  }
}

</mosaic_0001>

<llo_original>
// kernel: modelc_forward.1
$region0: #{modelc_forward.1}
  #allocation0 [shape = 'u32[]', space=smem, size = 0x4, offset = 0x4, fixed_abs, tag = 'smem constant byte address 0x4 - core index']
  #allocation1 [shape = 'u32[72,128]{1,0:T(1,128)}', space=vmem, size = 0x9000, scoped, tag = 'internal scratch']
  %s0 = inlined_call_operand.vmem [shape: f32[8,256], index: 0, kind: input, shape index: {}]
  %s1 = inlined_call_operand.vmem [shape: f32[256,100], index: 1, kind: input, shape index: {}]
  %s2 = inlined_call_operand.vmem [shape: f32[100,50], index: 2, kind: input, shape index: {}]
  %s3 = inlined_call_operand.vmem [shape: f32[50,10], index: 3, kind: input, shape index: {}]
  %s4 = inlined_call_operand.vmem [shape: f32[8,128], index: 4, kind: input, shape index: {}]
  %s5 = inlined_call_operand.hbm [shape: f32[8,10], index: 5, kind: output, shape index: {}]
  %s6 = sld [smem:[#allocation0]]
  $region30: #{modelc_forward.1} parent=0
    _
  %s8 = ssub.s32 1, %s6
  %s9 = scalar_select 0, %s8, %s6
  $region1: #{modelc_forward.1} parent=0
    #allocation2 [shape = 'u8[4096]{0}', space=vmem, size = 0x1000, scoped, tag = 'output window, operand 0, single buffered']
    #allocation3 [shape = 's32[1]{0}', space=sflag, size = 0x4, scoped, tag = 'scoped memory for modelc_forward.1']
    %10 = vsyncpa [#allocation3], 0
    // Predicated region
    $region2: #{modelc_forward.1} parent=1 // pred_check
      _
    $region3: #{modelc_forward.1} parent=1 // pred_check_branch
      %12 = sbr.rel (0) target = $region5
    $region4: #{modelc_forward.1} parent=1 // pred_region
      _
    $region5: #{modelc_forward.1} parent=1 // pred_fallthru
      _
    // Predicated region
    $region6: #{modelc_forward.1} parent=1 // pred_check
      _
    $region7: #{modelc_forward.1} parent=1 // pred_check_branch
      %14 = sbr.rel (0) target = $region9
    $region8: #{modelc_forward.1} parent=1 // pred_region
      _
    $region9: #{modelc_forward.1} parent=1 // pred_fallthru
      _
    // Predicated region
    $region10: #{modelc_forward.1} parent=1 // pred_check
      _
    $region11: #{modelc_forward.1} parent=1 // pred_check_branch
      %16 = sbr.rel (0) target = $region13
    $region12: #{modelc_forward.1} parent=1 // pred_region
      _
    $region13: #{modelc_forward.1} parent=1 // pred_fallthru
      _
    // Predicated region
    $region14: #{modelc_forward.1} parent=1 // pred_check
      _
    $region15: #{modelc_forward.1} parent=1 // pred_check_branch
      %18 = sbr.rel (0) target = $region17
    $region16: #{modelc_forward.1} parent=1 // pred_region
      _
    $region17: #{modelc_forward.1} parent=1 // pred_fallthru
      _
    // Predicated region
    $region18: #{modelc_forward.1} parent=1 // pred_check
      _
    $region19: #{modelc_forward.1} parent=1 // pred_check_branch
      %20 = sbr.rel (0) target = $region21
    $region20: #{modelc_forward.1} parent=1 // pred_region
      _
    $region21: #{modelc_forward.1} parent=1 // pred_fallthru
      _
    %v21 = vld [vmem:[%s0] sm:$0xff]
    %v22 = vld [vmem:[%s0 + $0x8] sm:$0xff]
    %v23 = vld [vmem:[%s4] sm:$0x1]
    %v24 = vld [vmem:[%s4 + $0x1] sm:$0x1]
    %v25 = vld [vmem:[%s4 + $0x2] sm:$0x1]
    %v26 = vld [vmem:[%s4 + $0x3] sm:$0x1]
    %v27 = vld [vmem:[%s4 + $0x4] sm:$0x1]
    %v28 = vld [vmem:[%s1] sm:$0xff]
    %v29 = vld [vmem:[%s1 + $0x8] sm:$0xff]
    %v30 = vld [vmem:[%s1 + $0x10] sm:$0xff]
    %v31 = vld [vmem:[%s1 + $0x18] sm:$0xff]
    %v32 = vld [vmem:[%s1 + $0x20] sm:$0xff]
    %v33 = vld [vmem:[%s1 + $0x28] sm:$0xff]
    %v34 = vld [vmem:[%s1 + $0x30] sm:$0xff]
    %v35 = vld [vmem:[%s1 + $0x38] sm:$0xff]
    %v36 = vld [vmem:[%s1 + $0x40] sm:$0xff]
    %v37 = vld [vmem:[%s1 + $0x48] sm:$0xff]
    %v38 = vld [vmem:[%s1 + $0x50] sm:$0xff]
    %v39 = vld [vmem:[%s1 + $0x58] sm:$0xff]
    %v40 = vld [vmem:[%s1 + $0x60] sm:$0xff]
    %v41 = vld [vmem:[%s1 + $0x68] sm:$0xff]
    %v42 = vld [vmem:[%s1 + $0x70] sm:$0xff]
    %v43 = vld [vmem:[%s1 + $0x78] sm:$0xff]
    %v44 = vld [vmem:[%s1 + $0x80] sm:$0xff]
    %v45 = vld [vmem:[%s1 + $0x88] sm:$0xff]
    %v46 = vld [vmem:[%s1 + $0x90] sm:$0xff]
    %v47 = vld [vmem:[%s1 + $0x98] sm:$0xff]
    %v48 = vld [vmem:[%s1 + $0xa0] sm:$0xff]
    %v49 = vld [vmem:[%s1 + $0xa8] sm:$0xff]
    %v50 = vld [vmem:[%s1 + $0xb0] sm:$0xff]
    %v51 = vld [vmem:[%s1 + $0xb8] sm:$0xff]
    %v52 = vld [vmem:[%s1 + $0xc0] sm:$0xff]
    %v53 = vld [vmem:[%s1 + $0xc8] sm:$0xff]
    %v54 = vld [vmem:[%s1 + $0xd0] sm:$0xff]
    %v55 = vld [vmem:[%s1 + $0xd8] sm:$0xff]
    %v56 = vld [vmem:[%s1 + $0xe0] sm:$0xff]
    %v57 = vld [vmem:[%s1 + $0xe8] sm:$0xff]
    %v58 = vld [vmem:[%s1 + $0xf0] sm:$0xff]
    %v59 = vld [vmem:[%s1 + $0xf8] sm:$0xff]
    %60 = vmatpush.msra.mxu0 %v43
    %61 = vmatpush.msra.mxu0 %v42
    %62 = vmatpush.msra.mxu0 %v41
    %63 = vmatpush.msra.mxu0 %v40
    %64 = vmatpush.msra.mxu0 %v39
    %65 = vmatpush.msra.mxu0 %v38
    %66 = vmatpush.msra.mxu0 %v37
    %67 = vmatpush.msra.mxu0 %v36
    %68 = vmatpush.msra.mxu0 %v35
    %69 = vmatpush.msra.mxu0 %v34
    %70 = vmatpush.msra.mxu0 %v33
    %71 = vmatpush.msra.mxu0 %v32
    %72 = vmatpush.msra.mxu0 %v31
    %73 = vmatpush.msra.mxu0 %v30
    %74 = vmatpush.msra.mxu0 %v29
    %75 = vmatpush.msra.mxu0 %v28
    %76 = vmatmul.f32.gmra.mxu0 %v21
    %v77 = vpop.f32.mrf.mxu0
    %v78 = vadd.f32 0.0, %v77
    %79 = vdwg.mxu0
    %80 = vmatpush.msra.mxu0 %v59
    %81 = vmatpush.msra.mxu0 %v58
    %82 = vmatpush.msra.mxu0 %v57
    %83 = vmatpush.msra.mxu0 %v56
    %84 = vmatpush.msra.mxu0 %v55
    %85 = vmatpush.msra.mxu0 %v54
    %86 = vmatpush.msra.mxu0 %v53
    %87 = vmatpush.msra.mxu0 %v52
    %88 = vmatpush.msra.mxu0 %v51
    %89 = vmatpush.msra.mxu0 %v50
    %90 = vmatpush.msra.mxu0 %v49
    %91 = vmatpush.msra.mxu0 %v48
    %92 = vmatpush.msra.mxu0 %v47
    %93 = vmatpush.msra.mxu0 %v46
    %94 = vmatpush.msra.mxu0 %v45
    %95 = vmatpush.msra.mxu0 %v44
    %96 = vmatmul.f32.gmra.mxu0 %v22
    %v97 = vpop.f32.mrf.mxu0
    %v98 = vadd.f32 %v78, %v97
    %99 = vdwg.mxu0
    %vm100 = vcmask 818176
    %v101 = vsel %vm100, %v98, 0.0
    %v102 = vrot.slane %v101, 4
    %v103 = vadd.f32 %v101, %v102
    %v104 = vrot.slane %v103, 2
    %v105 = vadd.f32 %v103, %v104
    %v106 = vrot.slane %v105, 1
    %v107 = vadd.f32 %v105, %v106
    %v108 = vrcp.pop 8.0
    %v109 = vmul.f32 8.0, %v108
    %v110 = vsub.f32 1.0, %v109
    %v111 = vmul.f32 %v108, %v110
    %v112 = vadd.f32 %v108, %v111
    %vm113 = vweird.f32 %v108
    %v114 = vsel %vm113, %v108, %v112
    %v115 = vmul.f32 %v107, %v114
    %v116 = vmul.f32 %v98, %v98
    %v117 = vsel %vm100, %v116, 0.0
    %v118 = vrot.slane %v117, 4
    %v119 = vadd.f32 %v117, %v118
    %v120 = vrot.slane %v119, 2
    %v121 = vadd.f32 %v119, %v120
    %v122 = vrot.slane %v121, 1
    %v123 = vadd.f32 %v121, %v122
    %v124 = vmul.f32 %v123, %v114
    %v125 = vmul.f32 %v115, %v115
    %v126 = vsub.f32 %v124, %v125
    %v127 = vadd.f32 %v126, 1e-05
    %v128 = vrsqrt.pop %v127
    %v129 = vmul.f32 %v128, %v127
    %v130 = vmul.f32 %v129, %v128
    %v131 = vmul.f32 0.5, %v130
    %v132 = vsub.f32 1.5, %v131
    %v133 = vmul.f32 %v128, %v132
    %vm134 = vweird.f32 %v127
    %vm135 = vweird.f32 %v128
    %vm136 = vmor %vm134, %vm135
    %v137 = vsel %vm136, %v128, %v133
    %v138 = vmul.f32 %v23, %v137
    %v139 = vmul.f32 %v115, %v138
    %v140 = vsub.f32 %v24, %v139
    %v141 = vperm.slane %v138, 0
    %v142 = vmul.f32 %v98, %v141
    %v143 = vperm.slane %v140, 0
    %v144 = vadd.f32 %v142, %v143
    %v145 = vmax.f32 %v144, 0.0
    %v146 = vld [vmem:[%s2] sm:$0xff]
    %v147 = vld [vmem:[%s2 + $0x8] sm:$0xff]
    %v148 = vld [vmem:[%s2 + $0x10] sm:$0xff]
    %v149 = vld [vmem:[%s2 + $0x18] sm:$0xff]
    %v150 = vld [vmem:[%s2 + $0x20] sm:$0xff]
    %v151 = vld [vmem:[%s2 + $0x28] sm:$0xff]
    %v152 = vld [vmem:[%s2 + $0x30] sm:$0xff]
    %v153 = vld [vmem:[%s2 + $0x38] sm:$0xff]
    %v154 = vld [vmem:[%s2 + $0x40] sm:$0xff]
    %v155 = vld [vmem:[%s2 + $0x48] sm:$0xff]
    %v156 = vld [vmem:[%s2 + $0x50] sm:$0xff]
    %v157 = vld [vmem:[%s2 + $0x58] sm:$0xff]
    %v158 = vld [vmem:[%s2 + $0x60] sm:$0xf]
    %v160 = vsel %vm100, %v145, 0
    %vm162 = vcmask 1043456
    %v164 = vsel %vm162, %v158, 0
    %166 = vmatpush.msra.mxu0 0.0
    %167 = vmatpush.msra.mxu0 0.0
    %168 = vmatpush.msra.mxu0 0.0
    %169 = vmatpush.msra.mxu0 %v164
    %170 = vmatpush.msra.mxu0 %v157
    %171 = vmatpush.msra.mxu0 %v156
    %172 = vmatpush.msra.mxu0 %v155
    %173 = vmatpush.msra.mxu0 %v154
    %174 = vmatpush.msra.mxu0 %v153
    %175 = vmatpush.msra.mxu0 %v152
    %176 = vmatpush.msra.mxu0 %v151
    %177 = vmatpush.msra.mxu0 %v150
    %178 = vmatpush.msra.mxu0 %v149
    %179 = vmatpush.msra.mxu0 %v148
    %180 = vmatpush.msra.mxu0 %v147
    %181 = vmatpush.msra.mxu0 %v146
    %182 = vmatmul.f32.gmra.mxu0 %v160
    %v183 = vpop.f32.mrf.mxu0
    %v184 = vadd.f32 0.0, %v183
    %185 = vdwg.mxu0
    %vm186 = vcmask 408576
    %v187 = vsel %vm186, %v184, 0.0
    %v188 = vrot.slane %v187, 4
    %v189 = vadd.f32 %v187, %v188
    %v190 = vrot.slane %v189, 2
    %v191 = vadd.f32 %v189, %v190
    %v192 = vrot.slane %v191, 1
    %v193 = vadd.f32 %v191, %v192
    %v194 = vmul.f32 %v193, %v114
    %v195 = vmul.f32 %v184, %v184
    %v196 = vsel %vm186, %v195, 0.0
    %v197 = vrot.slane %v196, 4
    %v198 = vadd.f32 %v196, %v197
    %v199 = vrot.slane %v198, 2
    %v200 = vadd.f32 %v198, %v199
    %v201 = vrot.slane %v200, 1
    %v202 = vadd.f32 %v200, %v201
    %v203 = vmul.f32 %v202, %v114
    %v204 = vmul.f32 %v194, %v194
    %v205 = vsub.f32 %v203, %v204
    %v206 = vadd.f32 %v205, 1e-05
    %v207 = vrsqrt.pop %v206
    %v208 = vmul.f32 %v207, %v206
    %v209 = vmul.f32 %v208, %v207
    %v210 = vmul.f32 0.5, %v209
    %v211 = vsub.f32 1.5, %v210
    %v212 = vmul.f32 %v207, %v211
    %vm213 = vweird.f32 %v206
    %vm214 = vweird.f32 %v207
    %vm215 = vmor %vm213, %vm214
    %v216 = vsel %vm215, %v207, %v212
    %v217 = vmul.f32 %v25, %v216
    %v218 = vmul.f32 %v194, %v217
    %v219 = vsub.f32 %v26, %v218
    %v220 = vperm.slane %v217, 0
    %v221 = vmul.f32 %v184, %v220
    %v222 = vperm.slane %v219, 0
    %v223 = vadd.f32 %v221, %v222
    %v224 = vmax.f32 %v223, 0.0
    %v225 = vld [vmem:[%s3] sm:$0xff]
    %v226 = vld [vmem:[%s3 + $0x8] sm:$0xff]
    %v227 = vld [vmem:[%s3 + $0x10] sm:$0xff]
    %v228 = vld [vmem:[%s3 + $0x18] sm:$0xff]
    %v229 = vld [vmem:[%s3 + $0x20] sm:$0xff]
    %v230 = vld [vmem:[%s3 + $0x28] sm:$0xff]
    %v231 = vld [vmem:[%s3 + $0x30] sm:$0x3]
    %v232 = vperm.slane %v27, 0
    %v234 = vsel %vm186, %v224, 0
    %vm236 = vcmask 1041408
    %v238 = vsel %vm236, %v231, 0
    %240 = vmatpush.msra.mxu0 0.0
    %241 = vmatpush.msra.mxu0 0.0
    %242 = vmatpush.msra.mxu0 0.0
    %243 = vmatpush.msra.mxu0 0.0
    %244 = vmatpush.msra.mxu0 0.0
    %245 = vmatpush.msra.mxu0 0.0
    %246 = vmatpush.msra.mxu0 0.0
    %247 = vmatpush.msra.mxu0 0.0
    %248 = vmatpush.msra.mxu0 0.0
    %249 = vmatpush.msra.mxu0 %v238
    %250 = vmatpush.msra.mxu0 %v230
    %251 = vmatpush.msra.mxu0 %v229
    %252 = vmatpush.msra.mxu0 %v228
    %253 = vmatpush.msra.mxu0 %v227
    %254 = vmatpush.msra.mxu0 %v226
    %255 = vmatpush.msra.mxu0 %v225
    %256 = vmatmul.f32.gmra.mxu0 %v234
    %v257 = vpop.f32.mrf.mxu0
    %v258 = vadd.f32 %v232, %v257
    %259 = vdwg.mxu0
    %vm260 = vcmask 80896
    %v261 = vsel %vm260, %v258, -inf
    %262 = vmax.xlane.f32.xlu0 %v261
    %v263 = vpop.xlane.xlu0 %262
    %v264 = vsub.f32 %v258, %v263
    %v265 = vmul.f32 %v264, 1.442695
    %v266 = vpow.pop %v265
    %v267 = vsel %vm260, %v266, 0.0
    %268 = vadd.xlane.f32.xlu0 %v267
    %v269 = vpop.xlane.xlu0 %268
    %v270 = vlog2.pop %v269
    %v271 = vmul.f32 %v270, 0.6931472
    %v272 = vsub.f32 %v264, %v271
    %273 = vst.msk [vmem:[#allocation2] sm:$0xff] %vm260, %v272
    // Predicated region
    $region22: #{modelc_forward.1} parent=1 // pred_check
      _
    $region23: #{modelc_forward.1} parent=1 // pred_check_branch
      %275 = sbr.rel (0) target = $region25
    $region24: #{modelc_forward.1} parent=1 // pred_region
      %277 = vsyncadd [#allocation3], 0
      %s279 = sshll.u32 [#allocation2], 4
      %s280 = int_to_ptr.vmem [resolvable:$true] %s279
      %s281 = sshll.u32 %s5, 4
      %s282 = int_to_ptr.hbm [resolvable:$true] %s281
      %284 = dma.vmem_to_hbm [thread:$0]  %s280, 128, %s282, [#allocation3]
    $region25: #{modelc_forward.1} parent=1 // pred_fallthru
      _
    // Predicated region
    $region26: #{modelc_forward.1} parent=1 // pred_check
      _
    $region27: #{modelc_forward.1} parent=1 // pred_check_branch
      %286 = sbr.rel (0) target = $region29
    $region28: #{modelc_forward.1} parent=1 // pred_region
      %288 = dma.done [#allocation3], 128
    $region29: #{modelc_forward.1} parent=1 // pred_fallthru
      _
    %289 = vsyncpa [#allocation3], 1

</llo_original>
